<compile_context>
chip_gen: v7x
topology: tpu7x:2x2x1
jax: 0.10.0
libtpu: 0.0.40
codegen_flags: <defaults>
</compile_context>

<pallas_src>
import functools

import jax
import jax.numpy as jnp
from jax.experimental import pallas as pl
from jax.experimental.pallas import tpu as pltpu


def _round_up(x, m):
    return ((x + m - 1) // m) * m


def _fit_rows(arr, n):
    """Slice or zero-pad the leading (row) dim of a 2-D array to exactly n rows."""
    r = arr.shape[0]
    if r == n:
        return arr
    if r > n:
        return arr[:n]
    return jnp.pad(arr, ((0, n - r), (0, 0)))


# ---------------------------------------------------------------------------
# Kernel 1: fused h = x @ W  +  f1/f2 projection epilogue.
#   x_ref  [tm, Fin]   w_ref [Fin, fpad]   a1/a2 [1, fpad] (lane-major rows)
#   h_ref  [tm, fpad]  (agg dtype)   f1_ref/f2_ref [tm, 1] (f32)
# ---------------------------------------------------------------------------
def _linear_proj_kernel(x_ref, w_ref, a1_ref, a2_ref, h_ref, f1_ref, f2_ref):
    h = jnp.dot(x_ref[...], w_ref[...], preferred_element_type=jnp.float32)
    # Epilogue on the tile already in VMEM: VPU broadcast-mul + lane reduce.
    f1_ref[...] = jnp.sum(h * a1_ref[...], axis=1, keepdims=True)
    f2_ref[...] = jnp.sum(h * a2_ref[...], axis=1, keepdims=True)
    h_ref[...] = h.astype(h_ref.dtype)


def _linear_proj(x_p, w_p, a1_row, a2_row, *, tm, agg_dtype):
    npad, fin = x_p.shape
    fpad = w_p.shape[1]
    return pl.pallas_call(
        _linear_proj_kernel,
        out_shape=(
            jax.ShapeDtypeStruct((npad, fpad), agg_dtype),   # h (agg dtype)
            jax.ShapeDtypeStruct((npad, 1), jnp.float32),    # f1
            jax.ShapeDtypeStruct((npad, 1), jnp.float32),    # f2
        ),
        grid=(npad // tm,),
        in_specs=[
            pl.BlockSpec((tm, fin), lambda i: (i, 0)),
            pl.BlockSpec((fin, fpad), lambda i: (0, 0)),
            pl.BlockSpec((1, fpad), lambda i: (0, 0)),
            pl.BlockSpec((1, fpad), lambda i: (0, 0)),
        ],
        out_specs=(
            pl.BlockSpec((tm, fpad), lambda i: (i, 0)),
            pl.BlockSpec((tm, 1), lambda i: (i, 0)),
            pl.BlockSpec((tm, 1), lambda i: (i, 0)),
        ),
        compiler_params=pltpu.CompilerParams(
            dimension_semantics=("parallel",)),
    )(x_p, w_p, a1_row, a2_row)


# ---------------------------------------------------------------------------
# Kernel 2: masked-softmax attention + aggregation (flash-attention style).
# ---------------------------------------------------------------------------
def _gat_attention_kernel(f1_ref, f2_ref, adj_ref, h_ref, out_ref,
                          m_sc, l_sc, acc_sc, *, alpha, concat, tk, h_resident):
    kv = pl.program_id(1)

    @pl.when(kv == 0)
    def _():
        m_sc[...] = jnp.full_like(m_sc, -jnp.inf)
        l_sc[...] = jnp.zeros_like(l_sc)
        acc_sc[...] = jnp.zeros_like(acc_sc)

    # e[i, j] = LeakyReLU(f1[i] + f2[j]) -- pure VPU broadcast add, no transpose.
    e = f1_ref[...] + f2_ref[...]                    # [tq,1] + [1,tk] -> [tq,tk]
    if 0.0 < alpha < 1.0:
        e = jnp.maximum(e, alpha * e)                # LeakyReLU in one VALU op
    else:
        e = jnp.where(e > 0.0, e, alpha * e)
    # Adjacency mask: int8 compare, scalar fill (no [tq,tk] full_like materialized).
    e = jnp.where(adj_ref[...] > 0, e, -9.0e10)

    # Online softmax over the kv axis (scores kept in f32).
    m_prev = m_sc[...]
    m_new = jnp.maximum(m_prev, jnp.max(e, axis=1, keepdims=True))
    corr = jnp.exp(m_prev - m_new)
    p = jnp.exp(e - m_new)
    l_sc[...] = corr * l_sc[...] + jnp.sum(p, axis=1, keepdims=True)

    if h_resident:
        # Whole h lives in VMEM (constant index_map); slice this step's kv rows.
        start = pl.multiple_of(kv * tk, tk)
        h_blk = h_ref[pl.ds(start, tk), :]
    else:
        h_blk = h_ref[...]
    # TODO(synk): training-mode attention dropout (pltpu.prng_seed +
    # pltpu.prng_random_bits); predict/eval path -> identity.
    acc_sc[...] = corr * acc_sc[...] + jnp.dot(
        p.astype(h_blk.dtype), h_blk, preferred_element_type=jnp.float32)
    m_sc[...] = m_new

    @pl.when(kv == pl.num_programs(1) - 1)
    def _():
        l = l_sc[...]
        inv_l = pl.reciprocal(l, approx=True)        # EUP slot (free-ish)
        inv_l = inv_l * (2.0 - l * inv_l)            # one NR step -> ~f32 accuracy
        hp = acc_sc[...] * inv_l
        if concat:
            # ELU; clamp the exp argument so the discarded lane cannot hit inf.
            hp = jnp.where(hp > 0.0, hp, jnp.exp(jnp.minimum(hp, 0.0)) - 1.0)
        out_ref[...] = hp.astype(out_ref.dtype)


# ---------------------------------------------------------------------------
# Wrapper
# ---------------------------------------------------------------------------
def graph_attention_layer(x, adj, W, a, *, alpha=0.2, concat=True,
                          tq=512, tk=2048, tm=256,
                          agg_dtype=jnp.bfloat16,
                          resident_h_bytes=6 * 2**20):
    """Forward pass of GraphAttentionLayer (eval mode).

    x:   [N, Fin] f32, adj: [N, N] (>0 means edge), W: [Fin, Fout], a: [2*Fout, 1].
    tq/tk are the query/kv tile sizes (clamped to the padded graph); agg_dtype is the
    precision of h / attention weights in the aggregation matmul (scores and the
    softmax itself stay f32).  Tiles and the explicit vmem_limit below are sized to
    stay within 64 MiB so the same config is safe on v5e/v6e (128 MiB) and v7x (64 MiB).
    """
    N, Fin = x.shape
    Fout = W.shape[1]

    fpad = _round_up(Fout, 128)                 # lane-dense MXU RHS / output
    n128 = _round_up(N, 128)
    tq_eff = min(_round_up(tq, 128), n128)
    tk_eff = min(_round_up(tk, 128), n128)
    tm_eff = min(_round_up(tm, 128), n128)
    npad_q = _round_up(N, tq_eff)               # independent query padding
    npad_k = _round_up(N, tk_eff)               # independent kv padding
    npad_lin = _round_up(N, tm_eff)

    x_p = jnp.pad(x.astype(jnp.float32), ((0, npad_lin - N), (0, 0)))
    w_p = jnp.pad(W.astype(jnp.float32), ((0, 0), (0, fpad - Fout)))
    # Lane-major a rows so the fused epilogue is a broadcast-mul + lane reduce.
    a1_row = jnp.pad(a[:Fout].astype(jnp.float32), ((0, fpad - Fout), (0, 0))).T
    a2_row = jnp.pad(a[Fout:].astype(jnp.float32), ((0, fpad - Fout), (0, 0))).T

    # int8 adjacency: 4x less HBM traffic than f32.
    # TODO(synk): for repeated inference, hoist/cache this preprocessing (and a
    # per-tile "has any edge" bitmap for block-sparse skipping via scalar prefetch).
    adj_i8 = jnp.pad((adj > 0).astype(jnp.int8),
                     ((0, npad_q - N), (0, npad_k - N)))

    # 1) Fused h = x @ W with f1/f2 epilogue (single pass over h in VMEM).
    h_lin, f1_lin, f2_lin = _linear_proj(x_p, w_p, a1_row, a2_row,
                                         tm=tm_eff, agg_dtype=agg_dtype)
    h_k = _fit_rows(h_lin, npad_k)              # kv-side h (agg dtype)
    f1_q = _fit_rows(f1_lin, npad_q)            # query column [npad_q, 1]
    f2_row = _fit_rows(f2_lin, npad_k).T        # lane-major row [1, npad_k]

    # 2) Decide whether h can stay fully VMEM-resident (kills the h re-stream).
    itemsize = jnp.dtype(agg_dtype).itemsize
    resident = npad_k * fpad * itemsize <= resident_h_bytes
    if resident:
        h_spec = pl.BlockSpec((npad_k, fpad), lambda i, j: (0, 0))
        h_rows_in_vmem = npad_k
    else:
        h_spec = pl.BlockSpec((tk_eff, fpad), lambda i, j: (j, 0))
        h_rows_in_vmem = tk_eff

    # Explicit VMEM budget for the chosen tiles (double-buffered inputs/outputs),
    # floored at 32 MiB (v5e's default scoped limit is only 16 MiB) and capped at
    # 64 MiB (v7x physical VMEM per TensorCore).
    vmem_need = (2 * tq_eff * tk_eff                      # adj (int8)
                 + 2 * h_rows_in_vmem * fpad * itemsize   # h
                 + 2 * tq_eff * fpad * 4                  # out
                 + tq_eff * fpad * 4                      # acc scratch
                 + 2 * (tq_eff + tk_eff) * 4              # f1 / f2
                 + (2 << 20))                             # slack
    vmem_limit = int(min(max(vmem_need, 32 * 2**20), 64 * 2**20))

    # 3) Tiled masked softmax + aggregation.
    kernel = functools.partial(_gat_attention_kernel, alpha=alpha, concat=concat,
                               tk=tk_eff, h_resident=resident)
    out_p = pl.pallas_call(
        kernel,
        out_shape=jax.ShapeDtypeStruct((npad_q, fpad), jnp.float32),
        grid_spec=pltpu.PrefetchScalarGridSpec(
            num_scalar_prefetch=0,
            grid=(npad_q // tq_eff, npad_k // tk_eff),    # reduction (kv) axis last
            in_specs=[
                pl.BlockSpec((tq_eff, 1), lambda i, j: (i, 0)),       # f1 column
                pl.BlockSpec((1, tk_eff), lambda i, j: (0, j)),       # f2 row
                pl.BlockSpec((tq_eff, tk_eff), lambda i, j: (i, j)),  # adj (int8)
                h_spec,                                               # h kv rows
            ],
            out_specs=pl.BlockSpec((tq_eff, fpad), lambda i, j: (i, 0)),
            scratch_shapes=[
                pltpu.VMEM((tq_eff, 1), jnp.float32),     # running max m
                pltpu.VMEM((tq_eff, 1), jnp.float32),     # running sum l
                pltpu.VMEM((tq_eff, fpad), jnp.float32),  # accumulator
            ],
        ),
        compiler_params=pltpu.CompilerParams(
            dimension_semantics=("parallel", "arbitrary"),
            vmem_limit_bytes=vmem_limit),
    )(f1_q, f2_row, adj_i8, h_k)

    return out_p[:N, :Fout]


def graph_attention_layer_ref(x, adj, W, a, *, alpha=0.2, concat=True):
    """Pure-JAX reference mirroring the PyTorch forward (eval mode)."""
    h = x @ W
    Fout = W.shape[1]
    f1 = h @ a[:Fout, :]
    f2 = h @ a[Fout:, :]
    e = jax.nn.leaky_relu(f1 + f2.T, negative_slope=alpha)
    att = jnp.where(adj > 0, e, -9.0e10)
    att = jax.nn.softmax(att, axis=1)
    hp = att @ h
    return jax.nn.elu(hp) if concat else hp


if __name__ == "__main__":
    # Small shapes consistent with the module: N nodes, in_features -> out_features.
    # N is deliberately NOT a multiple of the tile size to exercise the padding path.
    N, IN_F, OUT_F = 200, 48, 32
    ALPHA = 0.2

    key = jax.random.PRNGKey(0)
    kx, kadj, kw, ka = jax.random.split(key, 4)

    x = jax.random.normal(kx, (N, IN_F), dtype=jnp.float32)
    adj = (jax.random.uniform(kadj, (N, N)) > 0.5).astype(jnp.float32)
    adj = jnp.maximum(adj, jnp.eye(N, dtype=jnp.float32))     # self-loops
    W = jax.random.normal(kw, (IN_F, OUT_F), dtype=jnp.float32) * 0.1
    a = jax.random.normal(ka, (2 * OUT_F, 1), dtype=jnp.float32) * 0.1

    # Validate the exact (f32) path tightly and the fast bf16 path at a looser
    # tolerance appropriate for bf16 aggregation operands.
    for agg_dtype, atol, rtol in ((jnp.float32, 1e-3, 1e-3),
                                  (jnp.bfloat16, 1e-2, 1e-2)):
        for concat in (True, False):
            out = graph_attention_layer(x, adj, W, a, alpha=ALPHA, concat=concat,
                                        agg_dtype=agg_dtype)
            out = jax.block_until_ready(out)
            ref = graph_attention_layer_ref(x, adj, W, a, alpha=ALPHA, concat=concat)
            assert out.shape == (N, OUT_F)
            assert jnp.allclose(out, ref, atol=atol, rtol=rtol), (
                f"agg_dtype={agg_dtype}, concat={concat}: "
                f"max abs err = {jnp.max(jnp.abs(out - ref))}"
            )

    print("KERNEL_OK")
</pallas_src>

<mosaic_0001>
module attributes {stable_mosaic.version = 11 : i64} {
  func.func @_linear_proj_kernel(%arg0: i32, %arg1: memref<256x48xf32, #tpu.memory_space<vmem>>, %arg2: memref<48x128xf32, #tpu.memory_space<vmem>>, %arg3: memref<1x128xf32, #tpu.memory_space<vmem>>, %arg4: memref<1x128xf32, #tpu.memory_space<vmem>>, %arg5: memref<256x128xf32, #tpu.memory_space<vmem>>, %arg6: memref<256x1xf32, #tpu.memory_space<vmem>>, %arg7: memref<256x1xf32, #tpu.memory_space<vmem>>) attributes {dimension_semantics = [#tpu.dimension_semantics<parallel>], iteration_bounds = array<i64: 1>, scalar_prefetch = 0 : i64, scratch_operands = 0 : i64, tpu.core_type = #tpu.core_type<tc>, window_params = [{transform_indices = @transform_0, window_bounds = array<i64: 256, 48>}, {pipeline_mode = #tpu.pipeline_mode<synchronous>, transform_indices = @transform_1, window_bounds = array<i64: 48, 128>}, {pipeline_mode = #tpu.pipeline_mode<synchronous>, transform_indices = @transform_2, window_bounds = array<i64: 1, 128>}, {pipeline_mode = #tpu.pipeline_mode<synchronous>, transform_indices = @transform_3, window_bounds = array<i64: 1, 128>}, {transform_indices = @transform_4, window_bounds = array<i64: 256, 128>}, {transform_indices = @transform_5, window_bounds = array<i64: 256, 1>}, {transform_indices = @transform_6, window_bounds = array<i64: 256, 1>}]} {
    %c0 = arith.constant 0 : index
    %c0_0 = arith.constant 0 : index
    %0 = vector.load %arg1[%c0, %c0_0] : memref<256x48xf32, #tpu.memory_space<vmem>>, vector<256x48xf32>
    %c0_1 = arith.constant 0 : index
    %c0_2 = arith.constant 0 : index
    %1 = vector.load %arg2[%c0_1, %c0_2] : memref<48x128xf32, #tpu.memory_space<vmem>>, vector<48x128xf32>
    %cst = arith.constant dense<0.000000e+00> : vector<256x128xf32>
    %2 = tpu.matmul %0, %1, %cst {dimension_numbers = #tpu.dot_dimension_numbers<[1], [0], [0], [1], [0, 0, 1, 1], [], []>} : vector<256x48xf32>, vector<48x128xf32>, vector<256x128xf32> -> vector<256x128xf32>
    %c0_3 = arith.constant 0 : index
    %c0_4 = arith.constant 0 : index
    %3 = vector.load %arg3[%c0_3, %c0_4] : memref<1x128xf32, #tpu.memory_space<vmem>>, vector<1x128xf32>
    %4 = vector.broadcast %3 : vector<1x128xf32> to vector<256x128xf32>
    %5 = arith.mulf %2, %4 : vector<256x128xf32>
    %cst_5 = arith.constant dense<0.000000e+00> : vector<256xf32>
    %6 = vector.multi_reduction <add>, %5, %cst_5 [1] : vector<256x128xf32> to vector<256xf32>
    %7 = vector.shape_cast %6 : vector<256xf32> to vector<256x1xf32>
    %c0_6 = arith.constant 0 : index
    %c0_7 = arith.constant 0 : index
    %8 = vector.load %arg6[%c0_6, %c0_7] : memref<256x1xf32, #tpu.memory_space<vmem>>, vector<256x1xf32>
    tpu.vector_store %arg6[%c0_6, %c0_7], %7 {strides = array<i32>} : memref<256x1xf32, #tpu.memory_space<vmem>>, vector<256x1xf32>,
    %c0_8 = arith.constant 0 : index
    %c0_9 = arith.constant 0 : index
    %9 = vector.load %arg4[%c0_8, %c0_9] : memref<1x128xf32, #tpu.memory_space<vmem>>, vector<1x128xf32>
    %10 = vector.broadcast %9 : vector<1x128xf32> to vector<256x128xf32>
    %11 = arith.mulf %2, %10 : vector<256x128xf32>
    %cst_10 = arith.constant dense<0.000000e+00> : vector<256xf32>
    %12 = vector.multi_reduction <add>, %11, %cst_10 [1] : vector<256x128xf32> to vector<256xf32>
    %13 = vector.shape_cast %12 : vector<256xf32> to vector<256x1xf32>
    %c0_11 = arith.constant 0 : index
    %c0_12 = arith.constant 0 : index
    %14 = vector.load %arg7[%c0_11, %c0_12] : memref<256x1xf32, #tpu.memory_space<vmem>>, vector<256x1xf32>
    tpu.vector_store %arg7[%c0_11, %c0_12], %13 {strides = array<i32>} : memref<256x1xf32, #tpu.memory_space<vmem>>, vector<256x1xf32>,
    %c0_13 = arith.constant 0 : index
    %c0_14 = arith.constant 0 : index
    %15 = vector.load %arg5[%c0_13, %c0_14] : memref<256x128xf32, #tpu.memory_space<vmem>>, vector<256x128xf32>
    tpu.vector_store %arg5[%c0_13, %c0_14], %2 {strides = array<i32>} : memref<256x128xf32, #tpu.memory_space<vmem>>, vector<256x128xf32>,
    return
  }
  func.func @transform_0(%arg0: i32) -> (i32, i32) {
    %c0_i32 = arith.constant 0 : i32
    %c0_i32_0 = arith.constant 0 : i32
    return %arg0, %c0_i32 : i32, i32
  }
  func.func @transform_1(%arg0: i32) -> (i32, i32) {
    %c0_i32 = arith.constant 0 : i32
    %c0_i32_0 = arith.constant 0 : i32
    %c0_i32_1 = arith.constant 0 : i32
    return %c0_i32, %c0_i32_0 : i32, i32
  }
  func.func @transform_2(%arg0: i32) -> (i32, i32) {
    %c0_i32 = arith.constant 0 : i32
    %c0_i32_0 = arith.constant 0 : i32
    %c0_i32_1 = arith.constant 0 : i32
    return %c0_i32, %c0_i32_0 : i32, i32
  }
  func.func @transform_3(%arg0: i32) -> (i32, i32) {
    %c0_i32 = arith.constant 0 : i32
    %c0_i32_0 = arith.constant 0 : i32
    %c0_i32_1 = arith.constant 0 : i32
    return %c0_i32, %c0_i32_0 : i32, i32
  }
  func.func @transform_4(%arg0: i32) -> (i32, i32) {
    %c0_i32 = arith.constant 0 : i32
    %c0_i32_0 = arith.constant 0 : i32
    return %arg0, %c0_i32 : i32, i32
  }
  func.func @transform_5(%arg0: i32) -> (i32, i32) {
    %c0_i32 = arith.constant 0 : i32
    %c0_i32_0 = arith.constant 0 : i32
    return %arg0, %c0_i32 : i32, i32
  }
  func.func @transform_6(%arg0: i32) -> (i32, i32) {
    %c0_i32 = arith.constant 0 : i32
    %c0_i32_0 = arith.constant 0 : i32
    return %arg0, %c0_i32 : i32, i32
  }
}

</mosaic_0001>

<llo_original>
// kernel: tpu_custom_call.1
$region0: #{tpu_custom_call.1}
  #allocation0 [shape = 'u32[]', space=smem, size = 0x4, offset = 0x4, fixed_abs, tag = 'smem constant byte address 0x4 - core index']
  #allocation1 [shape = 'u32[144,128]{1,0:T(1,128)}', space=vmem, size = 0x12000, scoped, tag = 'internal scratch']
  %s0 = inlined_call_operand.vmem [shape: f32[256,48], index: 0, kind: input, shape index: {}]
  %s1 = inlined_call_operand.vmem [shape: f32[48,128], index: 1, kind: input, shape index: {}]
  %s2 = inlined_call_operand.vmem [shape: f32[1,128], index: 2, kind: input, shape index: {}]
  %s3 = inlined_call_operand.vmem [shape: f32[1,128], index: 3, kind: input, shape index: {}]
  %s4 = inlined_call_operand.hbm [shape: f32[256,128], index: 4, kind: output, shape index: {0}]
  %s5 = inlined_call_operand.vmem [shape: f32[256,1], index: 5, kind: output, shape index: {1}]
  %s6 = inlined_call_operand.vmem [shape: f32[256,1], index: 6, kind: output, shape index: {2}]
  %7 = xla_tuple %s4, %s5, %s6
  %s8 = sld [smem:[#allocation0]]
  $region42: #{tpu_custom_call.1} parent=0
    _
  %s10 = ssub.s32 1, %s8
  %s11 = scalar_select 0, %s10, %s8
  $region1: #{tpu_custom_call.1} parent=0
    #allocation2 [shape = 'u8[131072]{0}', space=vmem, size = 0x20000, scoped, tag = 'output window, operand 0, single buffered']
    #allocation3 [shape = 's32[1]{0}', space=sflag, size = 0x4, scoped, tag = 'scoped memory for tpu_custom_call.1']
    %12 = vsyncpa [#allocation3], 0
    // Predicated region
    $region2: #{tpu_custom_call.1} parent=1 // pred_check
      _
    $region3: #{tpu_custom_call.1} parent=1 // pred_check_branch
      %14 = sbr.rel (0) target = $region5
    $region4: #{tpu_custom_call.1} parent=1 // pred_region
      _
    $region5: #{tpu_custom_call.1} parent=1 // pred_fallthru
      _
    // Predicated region
    $region6: #{tpu_custom_call.1} parent=1 // pred_check
      _
    $region7: #{tpu_custom_call.1} parent=1 // pred_check_branch
      %16 = sbr.rel (0) target = $region9
    $region8: #{tpu_custom_call.1} parent=1 // pred_region
      _
    $region9: #{tpu_custom_call.1} parent=1 // pred_fallthru
      _
    // Predicated region
    $region10: #{tpu_custom_call.1} parent=1 // pred_check
      _
    $region11: #{tpu_custom_call.1} parent=1 // pred_check_branch
      %18 = sbr.rel (0) target = $region13
    $region12: #{tpu_custom_call.1} parent=1 // pred_region
      _
    $region13: #{tpu_custom_call.1} parent=1 // pred_fallthru
      _
    // Predicated region
    $region14: #{tpu_custom_call.1} parent=1 // pred_check
      _
    $region15: #{tpu_custom_call.1} parent=1 // pred_check_branch
      %20 = sbr.rel (0) target = $region17
    $region16: #{tpu_custom_call.1} parent=1 // pred_region
      _
    $region17: #{tpu_custom_call.1} parent=1 // pred_fallthru
      _
    %v21 = vld [vmem:[%s0] sm:$0xff]
    %v22 = vld [vmem:[%s0 + $0x8] sm:$0xff]
    %v23 = vld [vmem:[%s0 + $0x10] sm:$0xff]
    %v24 = vld [vmem:[%s0 + $0x18] sm:$0xff]
    %v25 = vld [vmem:[%s0 + $0x20] sm:$0xff]
    %v26 = vld [vmem:[%s0 + $0x28] sm:$0xff]
    %v27 = vld [vmem:[%s0 + $0x30] sm:$0xff]
    %v28 = vld [vmem:[%s0 + $0x38] sm:$0xff]
    %v29 = vld [vmem:[%s0 + $0x40] sm:$0xff]
    %v30 = vld [vmem:[%s0 + $0x48] sm:$0xff]
    %v31 = vld [vmem:[%s0 + $0x50] sm:$0xff]
    %v32 = vld [vmem:[%s0 + $0x58] sm:$0xff]
    %v33 = vld [vmem:[%s0 + $0x60] sm:$0xff]
    %v34 = vld [vmem:[%s0 + $0x68] sm:$0xff]
    %v35 = vld [vmem:[%s0 + $0x70] sm:$0xff]
    %v36 = vld [vmem:[%s0 + $0x78] sm:$0xff]
    %v37 = vld [vmem:[%s0 + $0x80] sm:$0xff]
    %v38 = vld [vmem:[%s0 + $0x88] sm:$0xff]
    %v39 = vld [vmem:[%s0 + $0x90] sm:$0xff]
    %v40 = vld [vmem:[%s0 + $0x98] sm:$0xff]
    %v41 = vld [vmem:[%s0 + $0xa0] sm:$0xff]
    %v42 = vld [vmem:[%s0 + $0xa8] sm:$0xff]
    %v43 = vld [vmem:[%s0 + $0xb0] sm:$0xff]
    %v44 = vld [vmem:[%s0 + $0xb8] sm:$0xff]
    %v45 = vld [vmem:[%s0 + $0xc0] sm:$0xff]
    %v46 = vld [vmem:[%s0 + $0xc8] sm:$0xff]
    %v47 = vld [vmem:[%s0 + $0xd0] sm:$0xff]
    %v48 = vld [vmem:[%s0 + $0xd8] sm:$0xff]
    %v49 = vld [vmem:[%s0 + $0xe0] sm:$0xff]
    %v50 = vld [vmem:[%s0 + $0xe8] sm:$0xff]
    %v51 = vld [vmem:[%s0 + $0xf0] sm:$0xff]
    %v52 = vld [vmem:[%s0 + $0xf8] sm:$0xff]
    %v53 = vld [vmem:[%s1] sm:$0xff]
    %v54 = vld [vmem:[%s1 + $0x8] sm:$0xff]
    %v55 = vld [vmem:[%s1 + $0x10] sm:$0xff]
    %v56 = vld [vmem:[%s1 + $0x18] sm:$0xff]
    %v57 = vld [vmem:[%s1 + $0x20] sm:$0xff]
    %v58 = vld [vmem:[%s1 + $0x28] sm:$0xff]
    %vm59 = vcmask 392192
    %v61 = vsel %vm59, %v21, 0
    %v64 = vsel %vm59, %v22, 0
    %v67 = vsel %vm59, %v23, 0
    %v70 = vsel %vm59, %v24, 0
    %v73 = vsel %vm59, %v25, 0
    %v76 = vsel %vm59, %v26, 0
    %v79 = vsel %vm59, %v27, 0
    %v82 = vsel %vm59, %v28, 0
    %v85 = vsel %vm59, %v29, 0
    %v88 = vsel %vm59, %v30, 0
    %v91 = vsel %vm59, %v31, 0
    %v94 = vsel %vm59, %v32, 0
    %v97 = vsel %vm59, %v33, 0
    %v100 = vsel %vm59, %v34, 0
    %v103 = vsel %vm59, %v35, 0
    %v106 = vsel %vm59, %v36, 0
    %v109 = vsel %vm59, %v37, 0
    %v112 = vsel %vm59, %v38, 0
    %v115 = vsel %vm59, %v39, 0
    %v118 = vsel %vm59, %v40, 0
    %v121 = vsel %vm59, %v41, 0
    %v124 = vsel %vm59, %v42, 0
    %v127 = vsel %vm59, %v43, 0
    %v130 = vsel %vm59, %v44, 0
    %v133 = vsel %vm59, %v45, 0
    %v136 = vsel %vm59, %v46, 0
    %v139 = vsel %vm59, %v47, 0
    %v142 = vsel %vm59, %v48, 0
    %v145 = vsel %vm59, %v49, 0
    %v148 = vsel %vm59, %v50, 0
    %v151 = vsel %vm59, %v51, 0
    %v154 = vsel %vm59, %v52, 0
    %156 = vmatprep.subr.mxu0 0.0
    %157 = vmatpush1.msra.mxu0 %v53
    %158 = vmatprep.subr.mxu0 0.0
    %159 = vmatpush1.msra.mxu0 %v54
    %160 = vmatprep.subr.mxu0 0.0
    %161 = vmatpush1.msra.mxu0 %v55
    %162 = vmatprep.subr.mxu0 0.0
    %163 = vmatpush1.msra.mxu0 %v56
    %164 = vmatprep.subr.mxu0 0.0
    %165 = vmatpush1.msra.mxu0 %v57
    %166 = vmatprep.subr.mxu0 0.0
    %167 = vmatpush1.msra.mxu0 %v58
    %168 = vmatprep.subr.mxu0 0.0
    %169 = vmatpush1.msra.mxu0 0.0
    %170 = vmatprep.subr.mxu0 0.0
    %171 = vmatpush1.msra.mxu0 0.0
    %172 = vmatprep.subr.mxu0 0.0
    %173 = vmatpush1.msra.mxu0 0.0
    %174 = vmatprep.subr.mxu0 0.0
    %175 = vmatpush1.msra.mxu0 0.0
    %176 = vmatprep.subr.mxu0 0.0
    %177 = vmatpush1.msra.mxu0 0.0
    %178 = vmatprep.subr.mxu0 0.0
    %179 = vmatpush1.msra.mxu0 0.0
    %180 = vmatprep.subr.mxu0 0.0
    %181 = vmatpush1.msra.mxu0 0.0
    %182 = vmatprep.subr.mxu0 0.0
    %183 = vmatpush1.msra.mxu0 0.0
    %184 = vmatprep.subr.mxu0 0.0
    %185 = vmatpush1.msra.mxu0 0.0
    %186 = vmatprep.subr.mxu0 0.0
    %187 = vmatpush1.msra.mxu0 0.0
    %188 = vmatprep.subr.mxu0 0.0
    %189 = vmatpush1.msra.mxu0 0.0
    %190 = vmatprep.subr.mxu0 0.0
    %191 = vmatpush1.msra.mxu0 0.0
    %192 = vmatprep.subr.mxu0 0.0
    %193 = vmatpush1.msra.mxu0 0.0
    %194 = vmatprep.subr.mxu0 0.0
    %195 = vmatpush1.msra.mxu0 0.0
    %196 = vmatprep.subr.mxu0 0.0
    %197 = vmatpush1.msra.mxu0 0.0
    %198 = vmatprep.subr.mxu0 0.0
    %199 = vmatpush1.msra.mxu0 0.0
    %200 = vmatprep.subr.mxu0 0.0
    %201 = vmatpush1.msra.mxu0 0.0
    %202 = vmatprep.subr.mxu0 0.0
    %203 = vmatpush1.msra.mxu0 0.0
    %204 = vmatprep.subr.mxu0 0.0
    %205 = vmatpush1.msra.mxu0 0.0
    %206 = vmatprep.subr.mxu0 0.0
    %207 = vmatpush1.msra.mxu0 0.0
    %208 = vmatprep.subr.mxu0 0.0
    %209 = vmatpush1.msra.mxu0 0.0
    %210 = vmatprep.subr.mxu0 0.0
    %211 = vmatpush1.msra.mxu0 0.0
    %212 = vmatprep.subr.mxu0 0.0
    %213 = vmatpush1.msra.mxu0 0.0
    %214 = vmatprep.subr.mxu0 0.0
    %215 = vmatpush1.msra.mxu0 0.0
    %216 = vmatprep.subr.mxu0 0.0
    %217 = vmatpush1.msra.mxu0 0.0
    %218 = vmatprep.subr.mxu0 0.0
    %219 = vmatpush1.msra.mxu0 0.0
    %220 = vmatprep.mubr.f32.mxu0 0.0
    %221 = vmatmul.mubr.f32.gmra.mrb[0].mxu0 %v61
    %v222 = vpop.f32.mrb[0].mxu0
    %v223 = vadd.f32 0.0, %v222
    %v224 = vpop.f32.mrb[0].mxu0
    %225 = vmatprep.mubr.f32.mxu0 0.0
    %226 = vmatmul.mubr.f32.gmra.mrb[0].mxu0 %v64
    %v227 = vpop.f32.mrb[0].mxu0
    %v228 = vadd.f32 0.0, %v227
    %v229 = vpop.f32.mrb[0].mxu0
    %230 = vmatprep.mubr.f32.mxu0 0.0
    %231 = vmatmul.mubr.f32.gmra.mrb[0].mxu0 %v67
    %v232 = vpop.f32.mrb[0].mxu0
    %v233 = vadd.f32 0.0, %v232
    %v234 = vpop.f32.mrb[0].mxu0
    %235 = vmatprep.mubr.f32.mxu0 0.0
    %236 = vmatmul.mubr.f32.gmra.mrb[0].mxu0 %v70
    %v237 = vpop.f32.mrb[0].mxu0
    %v238 = vadd.f32 0.0, %v237
    %v239 = vpop.f32.mrb[0].mxu0
    %240 = vmatprep.mubr.f32.mxu0 0.0
    %241 = vmatmul.mubr.f32.gmra.mrb[0].mxu0 %v73
    %v242 = vpop.f32.mrb[0].mxu0
    %v243 = vadd.f32 0.0, %v242
    %v244 = vpop.f32.mrb[0].mxu0
    %245 = vmatprep.mubr.f32.mxu0 0.0
    %246 = vmatmul.mubr.f32.gmra.mrb[0].mxu0 %v76
    %v247 = vpop.f32.mrb[0].mxu0
    %v248 = vadd.f32 0.0, %v247
    %v249 = vpop.f32.mrb[0].mxu0
    %250 = vmatprep.mubr.f32.mxu0 0.0
    %251 = vmatmul.mubr.f32.gmra.mrb[0].mxu0 %v79
    %v252 = vpop.f32.mrb[0].mxu0
    %v253 = vadd.f32 0.0, %v252
    %v254 = vpop.f32.mrb[0].mxu0
    %255 = vmatprep.mubr.f32.mxu0 0.0
    %256 = vmatmul.mubr.f32.gmra.mrb[0].mxu0 %v82
    %v257 = vpop.f32.mrb[0].mxu0
    %v258 = vadd.f32 0.0, %v257
    %v259 = vpop.f32.mrb[0].mxu0
    %260 = vmatprep.mubr.f32.mxu0 0.0
    %261 = vmatmul.mubr.f32.gmra.mrb[0].mxu0 %v85
    %v262 = vpop.f32.mrb[0].mxu0
    %v263 = vadd.f32 0.0, %v262
    %v264 = vpop.f32.mrb[0].mxu0
    %265 = vmatprep.mubr.f32.mxu0 0.0
    %266 = vmatmul.mubr.f32.gmra.mrb[0].mxu0 %v88
    %v267 = vpop.f32.mrb[0].mxu0
    %v268 = vadd.f32 0.0, %v267
    %v269 = vpop.f32.mrb[0].mxu0
    %270 = vmatprep.mubr.f32.mxu0 0.0
    %271 = vmatmul.mubr.f32.gmra.mrb[0].mxu0 %v91
    %v272 = vpop.f32.mrb[0].mxu0
    %v273 = vadd.f32 0.0, %v272
    %v274 = vpop.f32.mrb[0].mxu0
    %275 = vmatprep.mubr.f32.mxu0 0.0
    %276 = vmatmul.mubr.f32.gmra.mrb[0].mxu0 %v94
    %v277 = vpop.f32.mrb[0].mxu0
    %v278 = vadd.f32 0.0, %v277
    %v279 = vpop.f32.mrb[0].mxu0
    %280 = vmatprep.mubr.f32.mxu0 0.0
    %281 = vmatmul.mubr.f32.gmra.mrb[0].mxu0 %v97
    %v282 = vpop.f32.mrb[0].mxu0
    %v283 = vadd.f32 0.0, %v282
    %v284 = vpop.f32.mrb[0].mxu0
    %285 = vmatprep.mubr.f32.mxu0 0.0
    %286 = vmatmul.mubr.f32.gmra.mrb[0].mxu0 %v100
    %v287 = vpop.f32.mrb[0].mxu0
    %v288 = vadd.f32 0.0, %v287
    %v289 = vpop.f32.mrb[0].mxu0
    %290 = vmatprep.mubr.f32.mxu0 0.0
    %291 = vmatmul.mubr.f32.gmra.mrb[0].mxu0 %v103
    %v292 = vpop.f32.mrb[0].mxu0
    %v293 = vadd.f32 0.0, %v292
    %v294 = vpop.f32.mrb[0].mxu0
    %295 = vmatprep.mubr.f32.mxu0 0.0
    %296 = vmatmul.mubr.f32.gmra.mrb[0].mxu0 %v106
    %v297 = vpop.f32.mrb[0].mxu0
    %v298 = vadd.f32 0.0, %v297
    %v299 = vpop.f32.mrb[0].mxu0
    %300 = vmatprep.mubr.f32.mxu0 0.0
    %301 = vmatmul.mubr.f32.gmra.mrb[0].mxu0 %v109
    %v302 = vpop.f32.mrb[0].mxu0
    %v303 = vadd.f32 0.0, %v302
    %v304 = vpop.f32.mrb[0].mxu0
    %305 = vmatprep.mubr.f32.mxu0 0.0
    %306 = vmatmul.mubr.f32.gmra.mrb[0].mxu0 %v112
    %v307 = vpop.f32.mrb[0].mxu0
    %v308 = vadd.f32 0.0, %v307
    %v309 = vpop.f32.mrb[0].mxu0
    %310 = vmatprep.mubr.f32.mxu0 0.0
    %311 = vmatmul.mubr.f32.gmra.mrb[0].mxu0 %v115
    %v312 = vpop.f32.mrb[0].mxu0
    %v313 = vadd.f32 0.0, %v312
    %v314 = vpop.f32.mrb[0].mxu0
    %315 = vmatprep.mubr.f32.mxu0 0.0
    %316 = vmatmul.mubr.f32.gmra.mrb[0].mxu0 %v118
    %v317 = vpop.f32.mrb[0].mxu0
    %v318 = vadd.f32 0.0, %v317
    %v319 = vpop.f32.mrb[0].mxu0
    %320 = vmatprep.mubr.f32.mxu0 0.0
    %321 = vmatmul.mubr.f32.gmra.mrb[0].mxu0 %v121
    %v322 = vpop.f32.mrb[0].mxu0
    %v323 = vadd.f32 0.0, %v322
    %v324 = vpop.f32.mrb[0].mxu0
    %325 = vmatprep.mubr.f32.mxu0 0.0
    %326 = vmatmul.mubr.f32.gmra.mrb[0].mxu0 %v124
    %v327 = vpop.f32.mrb[0].mxu0
    %v328 = vadd.f32 0.0, %v327
    %v329 = vpop.f32.mrb[0].mxu0
    %330 = vmatprep.mubr.f32.mxu0 0.0
    %331 = vmatmul.mubr.f32.gmra.mrb[0].mxu0 %v127
    %v332 = vpop.f32.mrb[0].mxu0
    %v333 = vadd.f32 0.0, %v332
    %v334 = vpop.f32.mrb[0].mxu0
    %335 = vmatprep.mubr.f32.mxu0 0.0
    %336 = vmatmul.mubr.f32.gmra.mrb[0].mxu0 %v130
    %v337 = vpop.f32.mrb[0].mxu0
    %v338 = vadd.f32 0.0, %v337
    %v339 = vpop.f32.mrb[0].mxu0
    %340 = vmatprep.mubr.f32.mxu0 0.0
    %341 = vmatmul.mubr.f32.gmra.mrb[0].mxu0 %v133
    %v342 = vpop.f32.mrb[0].mxu0
    %v343 = vadd.f32 0.0, %v342
    %v344 = vpop.f32.mrb[0].mxu0
    %345 = vmatprep.mubr.f32.mxu0 0.0
    %346 = vmatmul.mubr.f32.gmra.mrb[0].mxu0 %v136
    %v347 = vpop.f32.mrb[0].mxu0
    %v348 = vadd.f32 0.0, %v347
    %v349 = vpop.f32.mrb[0].mxu0
    %350 = vmatprep.mubr.f32.mxu0 0.0
    %351 = vmatmul.mubr.f32.gmra.mrb[0].mxu0 %v139
    %v352 = vpop.f32.mrb[0].mxu0
    %v353 = vadd.f32 0.0, %v352
    %v354 = vpop.f32.mrb[0].mxu0
    %355 = vmatprep.mubr.f32.mxu0 0.0
    %356 = vmatmul.mubr.f32.gmra.mrb[0].mxu0 %v142
    %v357 = vpop.f32.mrb[0].mxu0
    %v358 = vadd.f32 0.0, %v357
    %v359 = vpop.f32.mrb[0].mxu0
    %360 = vmatprep.mubr.f32.mxu0 0.0
    %361 = vmatmul.mubr.f32.gmra.mrb[0].mxu0 %v145
    %v362 = vpop.f32.mrb[0].mxu0
    %v363 = vadd.f32 0.0, %v362
    %v364 = vpop.f32.mrb[0].mxu0
    %365 = vmatprep.mubr.f32.mxu0 0.0
    %366 = vmatmul.mubr.f32.gmra.mrb[0].mxu0 %v148
    %v367 = vpop.f32.mrb[0].mxu0
    %v368 = vadd.f32 0.0, %v367
    %v369 = vpop.f32.mrb[0].mxu0
    %370 = vmatprep.mubr.f32.mxu0 0.0
    %371 = vmatmul.mubr.f32.gmra.mrb[0].mxu0 %v151
    %v372 = vpop.f32.mrb[0].mxu0
    %v373 = vadd.f32 0.0, %v372
    %v374 = vpop.f32.mrb[0].mxu0
    %375 = vmatprep.mubr.f32.mxu0 0.0
    %376 = vmatmul.mubr.f32.gmra.mrb[0].mxu0 %v154
    %v377 = vpop.f32.mrb[0].mxu0
    %v378 = vadd.f32 0.0, %v377
    %v379 = vpop.f32.mrb[0].mxu0
    %380 = vdwg.mxu0
    %v381 = vld [vmem:[%s2] sm:$0x1]
    %v383 = vlaneseq
    %v384 = vshrl.u32 %v383, 7
    %v385 = vsub.s32 0, %v384
    %v386 = vrot.slane %v381, %v385
    %v388 = vmul.f32 %v223, %v386
    %v389 = vmul.f32 %v228, %v386
    %v390 = vmul.f32 %v233, %v386
    %v391 = vmul.f32 %v238, %v386
    %v392 = vmul.f32 %v243, %v386
    %v393 = vmul.f32 %v248, %v386
    %v394 = vmul.f32 %v253, %v386
    %v395 = vmul.f32 %v258, %v386
    %v396 = vmul.f32 %v263, %v386
    %v397 = vmul.f32 %v268, %v386
    %v398 = vmul.f32 %v273, %v386
    %v399 = vmul.f32 %v278, %v386
    %v400 = vmul.f32 %v283, %v386
    %v401 = vmul.f32 %v288, %v386
    %v402 = vmul.f32 %v293, %v386
    %v403 = vmul.f32 %v298, %v386
    %v404 = vmul.f32 %v303, %v386
    %v405 = vmul.f32 %v308, %v386
    %v406 = vmul.f32 %v313, %v386
    %v407 = vmul.f32 %v318, %v386
    %v408 = vmul.f32 %v323, %v386
    %v409 = vmul.f32 %v328, %v386
    %v410 = vmul.f32 %v333, %v386
    %v411 = vmul.f32 %v338, %v386
    %v412 = vmul.f32 %v343, %v386
    %v413 = vmul.f32 %v348, %v386
    %v414 = vmul.f32 %v353, %v386
    %v415 = vmul.f32 %v358, %v386
    %v416 = vmul.f32 %v363, %v386
    %v417 = vmul.f32 %v368, %v386
    %v418 = vmul.f32 %v373, %v386
    %v419 = vmul.f32 %v378, %v386
    %420 = vadd.xlane.f32.xlu0 %v388
    %v421 = vpop.xlane.xlu0 %420
    %422 = vadd.xlane.f32.xlu0 %v389
    %v423 = vpop.xlane.xlu0 %422
    %424 = vadd.xlane.f32.xlu0 %v390
    %v425 = vpop.xlane.xlu0 %424
    %426 = vadd.xlane.f32.xlu0 %v391
    %v427 = vpop.xlane.xlu0 %426
    %428 = vadd.xlane.f32.xlu0 %v392
    %v429 = vpop.xlane.xlu0 %428
    %430 = vadd.xlane.f32.xlu0 %v393
    %v431 = vpop.xlane.xlu0 %430
    %432 = vadd.xlane.f32.xlu0 %v394
    %v433 = vpop.xlane.xlu0 %432
    %434 = vadd.xlane.f32.xlu0 %v395
    %v435 = vpop.xlane.xlu0 %434
    %436 = vadd.xlane.f32.xlu0 %v396
    %v437 = vpop.xlane.xlu0 %436
    %438 = vadd.xlane.f32.xlu0 %v397
    %v439 = vpop.xlane.xlu0 %438
    %440 = vadd.xlane.f32.xlu0 %v398
    %v441 = vpop.xlane.xlu0 %440
    %442 = vadd.xlane.f32.xlu0 %v399
    %v443 = vpop.xlane.xlu0 %442
    %444 = vadd.xlane.f32.xlu0 %v400
    %v445 = vpop.xlane.xlu0 %444
    %446 = vadd.xlane.f32.xlu0 %v401
    %v447 = vpop.xlane.xlu0 %446
    %448 = vadd.xlane.f32.xlu0 %v402
    %v449 = vpop.xlane.xlu0 %448
    %450 = vadd.xlane.f32.xlu0 %v403
    %v451 = vpop.xlane.xlu0 %450
    %452 = vadd.xlane.f32.xlu0 %v404
    %v453 = vpop.xlane.xlu0 %452
    %454 = vadd.xlane.f32.xlu0 %v405
    %v455 = vpop.xlane.xlu0 %454
    %456 = vadd.xlane.f32.xlu0 %v406
    %v457 = vpop.xlane.xlu0 %456
    %458 = vadd.xlane.f32.xlu0 %v407
    %v459 = vpop.xlane.xlu0 %458
    %460 = vadd.xlane.f32.xlu0 %v408
    %v461 = vpop.xlane.xlu0 %460
    %462 = vadd.xlane.f32.xlu0 %v409
    %v463 = vpop.xlane.xlu0 %462
    %464 = vadd.xlane.f32.xlu0 %v410
    %v465 = vpop.xlane.xlu0 %464
    %466 = vadd.xlane.f32.xlu0 %v411
    %v467 = vpop.xlane.xlu0 %466
    %468 = vadd.xlane.f32.xlu0 %v412
    %v469 = vpop.xlane.xlu0 %468
    %470 = vadd.xlane.f32.xlu0 %v413
    %v471 = vpop.xlane.xlu0 %470
    %472 = vadd.xlane.f32.xlu0 %v414
    %v473 = vpop.xlane.xlu0 %472
    %474 = vadd.xlane.f32.xlu0 %v415
    %v475 = vpop.xlane.xlu0 %474
    %476 = vadd.xlane.f32.xlu0 %v416
    %v477 = vpop.xlane.xlu0 %476
    %478 = vadd.xlane.f32.xlu0 %v417
    %v479 = vpop.xlane.xlu0 %478
    %480 = vadd.xlane.f32.xlu0 %v418
    %v481 = vpop.xlane.xlu0 %480
    %482 = vadd.xlane.f32.xlu0 %v419
    %v483 = vpop.xlane.xlu0 %482
    %vm484 = vcmask 7168
    %485 = vst.msk [vmem:[%s5] sm:$0xff] %vm484, %v421
    %486 = vst.msk [vmem:[%s5 + $0x8] sm:$0xff] %vm484, %v423
    %487 = vst.msk [vmem:[%s5 + $0x10] sm:$0xff] %vm484, %v425
    %488 = vst.msk [vmem:[%s5 + $0x18] sm:$0xff] %vm484, %v427
    %489 = vst.msk [vmem:[%s5 + $0x20] sm:$0xff] %vm484, %v429
    %490 = vst.msk [vmem:[%s5 + $0x28] sm:$0xff] %vm484, %v431
    %491 = vst.msk [vmem:[%s5 + $0x30] sm:$0xff] %vm484, %v433
    %492 = vst.msk [vmem:[%s5 + $0x38] sm:$0xff] %vm484, %v435
    %493 = vst.msk [vmem:[%s5 + $0x40] sm:$0xff] %vm484, %v437
    %494 = vst.msk [vmem:[%s5 + $0x48] sm:$0xff] %vm484, %v439
    %495 = vst.msk [vmem:[%s5 + $0x50] sm:$0xff] %vm484, %v441
    %496 = vst.msk [vmem:[%s5 + $0x58] sm:$0xff] %vm484, %v443
    %497 = vst.msk [vmem:[%s5 + $0x60] sm:$0xff] %vm484, %v445
    %498 = vst.msk [vmem:[%s5 + $0x68] sm:$0xff] %vm484, %v447
    %499 = vst.msk [vmem:[%s5 + $0x70] sm:$0xff] %vm484, %v449
    %500 = vst.msk [vmem:[%s5 + $0x78] sm:$0xff] %vm484, %v451
    %501 = vst.msk [vmem:[%s5 + $0x80] sm:$0xff] %vm484, %v453
    %502 = vst.msk [vmem:[%s5 + $0x88] sm:$0xff] %vm484, %v455
    %503 = vst.msk [vmem:[%s5 + $0x90] sm:$0xff] %vm484, %v457
    %504 = vst.msk [vmem:[%s5 + $0x98] sm:$0xff] %vm484, %v459
    %505 = vst.msk [vmem:[%s5 + $0xa0] sm:$0xff] %vm484, %v461
    %506 = vst.msk [vmem:[%s5 + $0xa8] sm:$0xff] %vm484, %v463
    %507 = vst.msk [vmem:[%s5 + $0xb0] sm:$0xff] %vm484, %v465
    %508 = vst.msk [vmem:[%s5 + $0xb8] sm:$0xff] %vm484, %v467
    %509 = vst.msk [vmem:[%s5 + $0xc0] sm:$0xff] %vm484, %v469
    %510 = vst.msk [vmem:[%s5 + $0xc8] sm:$0xff] %vm484, %v471
    %511 = vst.msk [vmem:[%s5 + $0xd0] sm:$0xff] %vm484, %v473
    %512 = vst.msk [vmem:[%s5 + $0xd8] sm:$0xff] %vm484, %v475
    %513 = vst.msk [vmem:[%s5 + $0xe0] sm:$0xff] %vm484, %v477
    %514 = vst.msk [vmem:[%s5 + $0xe8] sm:$0xff] %vm484, %v479
    %515 = vst.msk [vmem:[%s5 + $0xf0] sm:$0xff] %vm484, %v481
    %516 = vst.msk [vmem:[%s5 + $0xf8] sm:$0xff] %vm484, %v483
    %v517 = vld [vmem:[%s3] sm:$0x1]
    %v519 = vlaneseq
    %v520 = vshrl.u32 %v519, 7
    %v521 = vsub.s32 0, %v520
    %v522 = vrot.slane %v517, %v521
    %v524 = vmul.f32 %v223, %v522
    %v525 = vmul.f32 %v228, %v522
    %v526 = vmul.f32 %v233, %v522
    %v527 = vmul.f32 %v238, %v522
    %v528 = vmul.f32 %v243, %v522
    %v529 = vmul.f32 %v248, %v522
    %v530 = vmul.f32 %v253, %v522
    %v531 = vmul.f32 %v258, %v522
    %v532 = vmul.f32 %v263, %v522
    %v533 = vmul.f32 %v268, %v522
    %v534 = vmul.f32 %v273, %v522
    %v535 = vmul.f32 %v278, %v522
    %v536 = vmul.f32 %v283, %v522
    %v537 = vmul.f32 %v288, %v522
    %v538 = vmul.f32 %v293, %v522
    %v539 = vmul.f32 %v298, %v522
    %v540 = vmul.f32 %v303, %v522
    %v541 = vmul.f32 %v308, %v522
    %v542 = vmul.f32 %v313, %v522
    %v543 = vmul.f32 %v318, %v522
    %v544 = vmul.f32 %v323, %v522
    %v545 = vmul.f32 %v328, %v522
    %v546 = vmul.f32 %v333, %v522
    %v547 = vmul.f32 %v338, %v522
    %v548 = vmul.f32 %v343, %v522
    %v549 = vmul.f32 %v348, %v522
    %v550 = vmul.f32 %v353, %v522
    %v551 = vmul.f32 %v358, %v522
    %v552 = vmul.f32 %v363, %v522
    %v553 = vmul.f32 %v368, %v522
    %v554 = vmul.f32 %v373, %v522
    %v555 = vmul.f32 %v378, %v522
    %556 = vadd.xlane.f32.xlu0 %v524
    %v557 = vpop.xlane.xlu0 %556
    %558 = vadd.xlane.f32.xlu0 %v525
    %v559 = vpop.xlane.xlu0 %558
    %560 = vadd.xlane.f32.xlu0 %v526
    %v561 = vpop.xlane.xlu0 %560
    %562 = vadd.xlane.f32.xlu0 %v527
    %v563 = vpop.xlane.xlu0 %562
    %564 = vadd.xlane.f32.xlu0 %v528
    %v565 = vpop.xlane.xlu0 %564
    %566 = vadd.xlane.f32.xlu0 %v529
    %v567 = vpop.xlane.xlu0 %566
    %568 = vadd.xlane.f32.xlu0 %v530
    %v569 = vpop.xlane.xlu0 %568
    %570 = vadd.xlane.f32.xlu0 %v531
    %v571 = vpop.xlane.xlu0 %570
    %572 = vadd.xlane.f32.xlu0 %v532
    %v573 = vpop.xlane.xlu0 %572
    %574 = vadd.xlane.f32.xlu0 %v533
    %v575 = vpop.xlane.xlu0 %574
    %576 = vadd.xlane.f32.xlu0 %v534
    %v577 = vpop.xlane.xlu0 %576
    %578 = vadd.xlane.f32.xlu0 %v535
    %v579 = vpop.xlane.xlu0 %578
    %580 = vadd.xlane.f32.xlu0 %v536
    %v581 = vpop.xlane.xlu0 %580
    %582 = vadd.xlane.f32.xlu0 %v537
    %v583 = vpop.xlane.xlu0 %582
    %584 = vadd.xlane.f32.xlu0 %v538
    %v585 = vpop.xlane.xlu0 %584
    %586 = vadd.xlane.f32.xlu0 %v539
    %v587 = vpop.xlane.xlu0 %586
    %588 = vadd.xlane.f32.xlu0 %v540
    %v589 = vpop.xlane.xlu0 %588
    %590 = vadd.xlane.f32.xlu0 %v541
    %v591 = vpop.xlane.xlu0 %590
    %592 = vadd.xlane.f32.xlu0 %v542
    %v593 = vpop.xlane.xlu0 %592
    %594 = vadd.xlane.f32.xlu0 %v543
    %v595 = vpop.xlane.xlu0 %594
    %596 = vadd.xlane.f32.xlu0 %v544
    %v597 = vpop.xlane.xlu0 %596
    %598 = vadd.xlane.f32.xlu0 %v545
    %v599 = vpop.xlane.xlu0 %598
    %600 = vadd.xlane.f32.xlu0 %v546
    %v601 = vpop.xlane.xlu0 %600
    %602 = vadd.xlane.f32.xlu0 %v547
    %v603 = vpop.xlane.xlu0 %602
    %604 = vadd.xlane.f32.xlu0 %v548
    %v605 = vpop.xlane.xlu0 %604
    %606 = vadd.xlane.f32.xlu0 %v549
    %v607 = vpop.xlane.xlu0 %606
    %608 = vadd.xlane.f32.xlu0 %v550
    %v609 = vpop.xlane.xlu0 %608
    %610 = vadd.xlane.f32.xlu0 %v551
    %v611 = vpop.xlane.xlu0 %610
    %612 = vadd.xlane.f32.xlu0 %v552
    %v613 = vpop.xlane.xlu0 %612
    %614 = vadd.xlane.f32.xlu0 %v553
    %v615 = vpop.xlane.xlu0 %614
    %616 = vadd.xlane.f32.xlu0 %v554
    %v617 = vpop.xlane.xlu0 %616
    %618 = vadd.xlane.f32.xlu0 %v555
    %v619 = vpop.xlane.xlu0 %618
    %620 = vst.msk [vmem:[%s6] sm:$0xff] %vm484, %v557
    %621 = vst.msk [vmem:[%s6 + $0x8] sm:$0xff] %vm484, %v559
    %622 = vst.msk [vmem:[%s6 + $0x10] sm:$0xff] %vm484, %v561
    %623 = vst.msk [vmem:[%s6 + $0x18] sm:$0xff] %vm484, %v563
    %624 = vst.msk [vmem:[%s6 + $0x20] sm:$0xff] %vm484, %v565
    %625 = vst.msk [vmem:[%s6 + $0x28] sm:$0xff] %vm484, %v567
    %626 = vst.msk [vmem:[%s6 + $0x30] sm:$0xff] %vm484, %v569
    %627 = vst.msk [vmem:[%s6 + $0x38] sm:$0xff] %vm484, %v571
    %628 = vst.msk [vmem:[%s6 + $0x40] sm:$0xff] %vm484, %v573
    %629 = vst.msk [vmem:[%s6 + $0x48] sm:$0xff] %vm484, %v575
    %630 = vst.msk [vmem:[%s6 + $0x50] sm:$0xff] %vm484, %v577
    %631 = vst.msk [vmem:[%s6 + $0x58] sm:$0xff] %vm484, %v579
    %632 = vst.msk [vmem:[%s6 + $0x60] sm:$0xff] %vm484, %v581
    %633 = vst.msk [vmem:[%s6 + $0x68] sm:$0xff] %vm484, %v583
    %634 = vst.msk [vmem:[%s6 + $0x70] sm:$0xff] %vm484, %v585
    %635 = vst.msk [vmem:[%s6 + $0x78] sm:$0xff] %vm484, %v587
    %636 = vst.msk [vmem:[%s6 + $0x80] sm:$0xff] %vm484, %v589
    %637 = vst.msk [vmem:[%s6 + $0x88] sm:$0xff] %vm484, %v591
    %638 = vst.msk [vmem:[%s6 + $0x90] sm:$0xff] %vm484, %v593
    %639 = vst.msk [vmem:[%s6 + $0x98] sm:$0xff] %vm484, %v595
    %640 = vst.msk [vmem:[%s6 + $0xa0] sm:$0xff] %vm484, %v597
    %641 = vst.msk [vmem:[%s6 + $0xa8] sm:$0xff] %vm484, %v599
    %642 = vst.msk [vmem:[%s6 + $0xb0] sm:$0xff] %vm484, %v601
    %643 = vst.msk [vmem:[%s6 + $0xb8] sm:$0xff] %vm484, %v603
    %644 = vst.msk [vmem:[%s6 + $0xc0] sm:$0xff] %vm484, %v605
    %645 = vst.msk [vmem:[%s6 + $0xc8] sm:$0xff] %vm484, %v607
    %646 = vst.msk [vmem:[%s6 + $0xd0] sm:$0xff] %vm484, %v609
    %647 = vst.msk [vmem:[%s6 + $0xd8] sm:$0xff] %vm484, %v611
    %648 = vst.msk [vmem:[%s6 + $0xe0] sm:$0xff] %vm484, %v613
    %649 = vst.msk [vmem:[%s6 + $0xe8] sm:$0xff] %vm484, %v615
    %650 = vst.msk [vmem:[%s6 + $0xf0] sm:$0xff] %vm484, %v617
    %651 = vst.msk [vmem:[%s6 + $0xf8] sm:$0xff] %vm484, %v619
    %652 = vst [vmem:[#allocation2] sm:$0xff] %v223
    %653 = vst [vmem:[#allocation2 + $0x8] sm:$0xff] %v228
    %654 = vst [vmem:[#allocation2 + $0x10] sm:$0xff] %v233
    %655 = vst [vmem:[#allocation2 + $0x18] sm:$0xff] %v238
    %656 = vst [vmem:[#allocation2 + $0x20] sm:$0xff] %v243
    %657 = vst [vmem:[#allocation2 + $0x28] sm:$0xff] %v248
    %658 = vst [vmem:[#allocation2 + $0x30] sm:$0xff] %v253
    %659 = vst [vmem:[#allocation2 + $0x38] sm:$0xff] %v258
    %660 = vst [vmem:[#allocation2 + $0x40] sm:$0xff] %v263
    %661 = vst [vmem:[#allocation2 + $0x48] sm:$0xff] %v268
    %662 = vst [vmem:[#allocation2 + $0x50] sm:$0xff] %v273
    %663 = vst [vmem:[#allocation2 + $0x58] sm:$0xff] %v278
    %664 = vst [vmem:[#allocation2 + $0x60] sm:$0xff] %v283
    %665 = vst [vmem:[#allocation2 + $0x68] sm:$0xff] %v288
    %666 = vst [vmem:[#allocation2 + $0x70] sm:$0xff] %v293
    %667 = vst [vmem:[#allocation2 + $0x78] sm:$0xff] %v298
    %668 = vst [vmem:[#allocation2 + $0x80] sm:$0xff] %v303
    %669 = vst [vmem:[#allocation2 + $0x88] sm:$0xff] %v308
    %670 = vst [vmem:[#allocation2 + $0x90] sm:$0xff] %v313
    %671 = vst [vmem:[#allocation2 + $0x98] sm:$0xff] %v318
    %672 = vst [vmem:[#allocation2 + $0xa0] sm:$0xff] %v323
    %673 = vst [vmem:[#allocation2 + $0xa8] sm:$0xff] %v328
    %674 = vst [vmem:[#allocation2 + $0xb0] sm:$0xff] %v333
    %675 = vst [vmem:[#allocation2 + $0xb8] sm:$0xff] %v338
    %676 = vst [vmem:[#allocation2 + $0xc0] sm:$0xff] %v343
    %677 = vst [vmem:[#allocation2 + $0xc8] sm:$0xff] %v348
    %678 = vst [vmem:[#allocation2 + $0xd0] sm:$0xff] %v353
    %679 = vst [vmem:[#allocation2 + $0xd8] sm:$0xff] %v358
    %680 = vst [vmem:[#allocation2 + $0xe0] sm:$0xff] %v363
    %681 = vst [vmem:[#allocation2 + $0xe8] sm:$0xff] %v368
    %682 = vst [vmem:[#allocation2 + $0xf0] sm:$0xff] %v373
    %683 = vst [vmem:[#allocation2 + $0xf8] sm:$0xff] %v378
    // Predicated region
    $region18: #{tpu_custom_call.1} parent=1 // pred_check
      _
    $region19: #{tpu_custom_call.1} parent=1 // pred_check_branch
      %685 = sbr.rel (0) target = $region21
    $region20: #{tpu_custom_call.1} parent=1 // pred_region
      %s687 = ssub.s32 4096, 4096
      %688 = vsyncadd [#allocation3], %s687
      %s689 = sshll.u32 [#allocation2], 4
      %s690 = int_to_ptr.vmem [resolvable:$true] %s689
      %695 = dma.vmem_to_hbm [thread:$0]  %s690, 4096, %s4, [#allocation3], 128, 128, 8
    $region21: #{tpu_custom_call.1} parent=1 // pred_fallthru
      _
    // Predicated region
    $region22: #{tpu_custom_call.1} parent=1 // pred_check
      _
    $region23: #{tpu_custom_call.1} parent=1 // pred_check_branch
      %697 = sbr.rel (0) target = $region25
    $region24: #{tpu_custom_call.1} parent=1 // pred_region
      _
    $region25: #{tpu_custom_call.1} parent=1 // pred_fallthru
      _
    // Predicated region
    $region26: #{tpu_custom_call.1} parent=1 // pred_check
      _
    $region27: #{tpu_custom_call.1} parent=1 // pred_check_branch
      %699 = sbr.rel (0) target = $region29
    $region28: #{tpu_custom_call.1} parent=1 // pred_region
      _
    $region29: #{tpu_custom_call.1} parent=1 // pred_fallthru
      _
    // Predicated region
    $region30: #{tpu_custom_call.1} parent=1 // pred_check
      _
    $region31: #{tpu_custom_call.1} parent=1 // pred_check_branch
      %701 = sbr.rel (0) target = $region33
    $region32: #{tpu_custom_call.1} parent=1 // pred_region
      %702 = dma.done [#allocation3], 4096
    $region33: #{tpu_custom_call.1} parent=1 // pred_fallthru
      _
    // Predicated region
    $region34: #{tpu_custom_call.1} parent=1 // pred_check
      _
    $region35: #{tpu_custom_call.1} parent=1 // pred_check_branch
      %704 = sbr.rel (0) target = $region37
    $region36: #{tpu_custom_call.1} parent=1 // pred_region
      _
    $region37: #{tpu_custom_call.1} parent=1 // pred_fallthru
      _
    // Predicated region
    $region38: #{tpu_custom_call.1} parent=1 // pred_check
      _
    $region39: #{tpu_custom_call.1} parent=1 // pred_check_branch
      %706 = sbr.rel (0) target = $region41
    $region40: #{tpu_custom_call.1} parent=1 // pred_region
      _
    $region41: #{tpu_custom_call.1} parent=1 // pred_fallthru
      _
    %707 = vsyncpa [#allocation3], 1

</llo_original>
